<compile_context>
chip_gen: v7x
topology: tpu7x:2x2x1
jax: 0.10.0
libtpu: 0.0.40
codegen_flags: <defaults>
</compile_context>

<pallas_src>
import jax
import jax.numpy as jnp
from jax.experimental import pallas as pl
from jax.experimental.pallas import tpu as pltpu

# ITU-R 601-2 luma weights used by torchvision's rgb_to_grayscale.
_WR, _WG, _WB = 0.2989, 0.587, 0.114


def _rgb_to_gray_kernel(img_ref, out_ref):
    # img_ref: (3, tR, L)   out_ref: (tR, L)
    r = img_ref[0].astype(jnp.float32)
    g = img_ref[1].astype(jnp.float32)
    b = img_ref[2].astype(jnp.float32)
    out_ref[...] = (_WR * r + _WG * g + _WB * b).astype(out_ref.dtype)


def _pick_lane_width(N, max_lanes=2048):
    """Largest multiple-of-128 divisor of N (capped), or None if N % 128 != 0."""
    if N % 128 != 0:
        return None
    for lanes in range(min(N, max_lanes), 127, -128):
        if N % lanes == 0:
            return lanes
    return 128


def _pick_row_tile(rows, lanes, itemsize, budget_bytes=8 << 20):
    """Largest multiple-of-8 divisor of `rows` keeping double-buffered blocks small."""
    per_row = 2 * (3 + 1) * lanes * itemsize   # 3 in rows + 1 out row, x2 buffers
    max_rows = max(8, budget_bytes // max(per_row, 1))
    if rows <= max_rows:
        return rows
    t = (max_rows // 8) * 8
    while t >= 8:
        if rows % t == 0:
            return t
        t -= 8
    return rows  # no legal divisor -> single full-rows block (always legal)


def _rgb_to_grayscale(img):
    """(B, 3, H, W) -> (B, 1, H, W), torchvision rgb_to_grayscale semantics."""
    B, C, H, W = img.shape
    assert C == 3, "rgb_to_grayscale expects 3 input channels"
    itemsize = jnp.dtype(img.dtype).itemsize
    N = H * W

    lanes = _pick_lane_width(N)
    if lanes is None:
        rows, lanes = H, W                      # native plane; full-dim blocks stay legal
    else:
        rows = N // lanes
    img2d = img.reshape(B, 3, rows, lanes)      # metadata-only for contiguous NCHW

    tR = _pick_row_tile(rows, lanes, itemsize)
    grid = (B, rows // tR)

    cost = pl.CostEstimate(
        flops=5 * B * N,                              # 3 mul + 2 add per output pixel
        transcendentals=0,
        bytes_accessed=(3 + 1) * B * N * itemsize,    # read 3 planes, write 1
    )

    out = pl.pallas_call(
        _rgb_to_gray_kernel,
        out_shape=jax.ShapeDtypeStruct((B, rows, lanes), img.dtype),
        grid=grid,
        in_specs=[pl.BlockSpec((None, 3, tR, lanes), lambda b, r: (b, 0, r, 0))],
        out_specs=pl.BlockSpec((None, tR, lanes), lambda b, r: (b, r, 0)),
        compiler_params=pltpu.CompilerParams(
            dimension_semantics=("parallel", "parallel"),
        ),
        cost_estimate=cost,
    )(img2d)
    return out.reshape(B, 1, H, W)              # metadata-only


def rcs_to_grayscale(x, y):
    """Pallas equivalent of RcsToGrayscale.forward((x, y))."""
    # TODO(synk): integer-dtype inputs would need torchvision's round-then-cast;
    # this covers floating-point images (the OCT preproc use case).
    return _rgb_to_grayscale(x), _rgb_to_grayscale(y)


if __name__ == "__main__":
    key = jax.random.PRNGKey(0)
    kx, ky = jax.random.split(key)

    # Small NCHW RGB inputs.
    B, C, H, W = 2, 3, 16, 128
    x = jax.random.uniform(kx, (B, C, H, W), dtype=jnp.float32)
    y = jax.random.uniform(ky, (B, C, H, W), dtype=jnp.float32)

    gx, gy = rcs_to_grayscale(x, y)
    jax.block_until_ready((gx, gy))

    # Reference (plain JAX) check of exact semantics.
    def ref(img):
        return (_WR * img[:, 0] + _WG * img[:, 1] + _WB * img[:, 2])[:, None].astype(img.dtype)

    assert gx.shape == (B, 1, H, W) and gy.shape == (B, 1, H, W)
    assert gx.dtype == x.dtype and gy.dtype == y.dtype
    assert jnp.allclose(gx, ref(x), rtol=1e-6, atol=1e-6)
    assert jnp.allclose(gy, ref(y), rtol=1e-6, atol=1e-6)

    print("KERNEL_OK")
</pallas_src>

<mosaic_0001>
module attributes {stable_mosaic.version = 11 : i64} {
  func.func @_rgb_to_gray_kernel(%arg0: i32, %arg1: i32, %arg2: memref<1x3x1x2048xf32, #tpu.memory_space<vmem>>, %arg3: memref<1x1x2048xf32, #tpu.memory_space<vmem>>) attributes {dimension_semantics = [#tpu.dimension_semantics<parallel>, #tpu.dimension_semantics<parallel>], iteration_bounds = array<i64: 2, 1>, scalar_prefetch = 0 : i64, scratch_operands = 0 : i64, tpu.core_type = #tpu.core_type<tc>, window_params = [{transform_indices = @transform_0, window_bounds = array<i64: 1, 3, 1, 2048>}, {transform_indices = @transform_1, window_bounds = array<i64: 1, 1, 2048>}]} {
    %c0 = arith.constant 0 : index
    %c0_0 = arith.constant 0 : index
    %c0_1 = arith.constant 0 : index
    %c0_2 = arith.constant 0 : index
    %0 = vector.load %arg2[%c0, %c0_0, %c0_1, %c0_2] : memref<1x3x1x2048xf32, #tpu.memory_space<vmem>>, vector<1x1x1x2048xf32>
    %1 = vector.shape_cast %0 : vector<1x1x1x2048xf32> to vector<1x2048xf32>
    %c0_3 = arith.constant 0 : index
    %c1 = arith.constant 1 : index
    %c0_4 = arith.constant 0 : index
    %c0_5 = arith.constant 0 : index
    %2 = vector.load %arg2[%c0_3, %c1, %c0_4, %c0_5] : memref<1x3x1x2048xf32, #tpu.memory_space<vmem>>, vector<1x1x1x2048xf32>
    %3 = vector.shape_cast %2 : vector<1x1x1x2048xf32> to vector<1x2048xf32>
    %c0_6 = arith.constant 0 : index
    %c2 = arith.constant 2 : index
    %c0_7 = arith.constant 0 : index
    %c0_8 = arith.constant 0 : index
    %4 = vector.load %arg2[%c0_6, %c2, %c0_7, %c0_8] : memref<1x3x1x2048xf32, #tpu.memory_space<vmem>>, vector<1x1x1x2048xf32>
    %5 = vector.shape_cast %4 : vector<1x1x1x2048xf32> to vector<1x2048xf32>
    %cst = arith.constant 2.989000e-01 : f32
    %6 = vector.broadcast %cst : f32 to vector<1x2048xf32>
    %7 = arith.mulf %6, %1 : vector<1x2048xf32>
    %cst_9 = arith.constant 5.870000e-01 : f32
    %8 = vector.broadcast %cst_9 : f32 to vector<1x2048xf32>
    %9 = arith.mulf %8, %3 : vector<1x2048xf32>
    %10 = arith.addf %7, %9 : vector<1x2048xf32>
    %cst_10 = arith.constant 1.140000e-01 : f32
    %11 = vector.broadcast %cst_10 : f32 to vector<1x2048xf32>
    %12 = arith.mulf %11, %5 : vector<1x2048xf32>
    %13 = arith.addf %10, %12 : vector<1x2048xf32>
    %c0_11 = arith.constant 0 : index
    %c0_12 = arith.constant 0 : index
    %c0_13 = arith.constant 0 : index
    %14 = vector.load %arg3[%c0_11, %c0_12, %c0_13] : memref<1x1x2048xf32, #tpu.memory_space<vmem>>, vector<1x1x2048xf32>
    %15 = vector.shape_cast %14 : vector<1x1x2048xf32> to vector<1x2048xf32>
    %16 = vector.shape_cast %13 : vector<1x2048xf32> to vector<1x1x2048xf32>
    tpu.vector_store %arg3[%c0_11, %c0_12, %c0_13], %16 {strides = array<i32>} : memref<1x1x2048xf32, #tpu.memory_space<vmem>>, vector<1x1x2048xf32>,
    return
  }
  func.func @transform_0(%arg0: i32, %arg1: i32) -> (i32, i32, i32, i32) {
    %c0_i32 = arith.constant 0 : i32
    %c0_i32_0 = arith.constant 0 : i32
    %c0_i32_1 = arith.constant 0 : i32
    return %arg0, %c0_i32, %arg1, %c0_i32_0 : i32, i32, i32, i32
  }
  func.func @transform_1(%arg0: i32, %arg1: i32) -> (i32, i32, i32) {
    %c0_i32 = arith.constant 0 : i32
    %c0_i32_0 = arith.constant 0 : i32
    return %arg0, %arg1, %c0_i32 : i32, i32, i32
  }
}

</mosaic_0001>

<llo_original>
// kernel: tpu_custom_call.1
$region0: #{tpu_custom_call.1}
  #allocation0 [shape = 'u32[]', space=smem, size = 0x4, offset = 0x4, fixed_abs, tag = 'smem constant byte address 0x4 - core index']
  #allocation1 [shape = 'u32[144,128]{1,0:T(1,128)}', space=vmem, size = 0x12000, scoped, tag = 'internal scratch']
  %s0 = inlined_call_operand.hbm [shape: f32[2,3,1,2048], index: 0, kind: input, shape index: {}]
  %s1 = inlined_call_operand.hbm [shape: f32[2,1,2048], index: 1, kind: output, shape index: {}]
  %s2 = sld [smem:[#allocation0]]
  $region41: #{tpu_custom_call.1} parent=0
    _
  %s4 = ssub.s32 1, %s2
  %s5 = scalar_select 0, %s4, %s2
  $region1: #{tpu_custom_call.1} parent=0
    #allocation2 [shape = 'u8[49152]{0}', space=vmem, size = 0xc000, scoped, tag = 'input window, operand 0']
    #allocation3 [shape = 's32[2]{0}', space=sflag, size = 0x8, scoped, tag = 'scoped memory for tpu_custom_call.1']
    #allocation4 [shape = 's32[2]{0}', space=sflag, size = 0x8, scoped, tag = 'scoped memory for tpu_custom_call.1']
    #allocation5 [shape = 'u8[16384]{0}', space=vmem, size = 0x4000, scoped, tag = 'output window, operand 0']
    %6 = vsyncpa [#allocation3], 0
    %s7 = scalar_lea.sflag [#allocation3], 1
    %8 = vsyncpa %s7, 0
    %9 = vsyncpa [#allocation4], 0
    %s10 = scalar_lea.sflag [#allocation4], 1
    %11 = vsyncpa %s10, 0
    loop: start=0, step=1, limit=4
    $region2: #{tpu_custom_call.1} parent=1 // loop_pre_header
      _
    $region3: #{tpu_custom_call.1} parent=1 // loop_header
      %s13 = sphi 0, %s17
      %p14 = scmp.ge.s32.totalorder %s13, 4
      %s20 = sphi 0, %s32
      %s21 = sphi 0, %s28
      %s22 = sphi 0, %s20
      %s23 = sphi 0, %s21
      %s24 = sphi 0, %s22
      %s25 = sphi 0, %s23
      %s37 = sphi 0, %s39
      %s40 = sphi 0, %s37
      %s41 = sphi 0, %s40
      %s57 = sphi 0, %s41
      %s65 = sphi 0, %s67
      %s68 = sphi 0, %s65
      %s69 = sphi 0, %s68
      %s85 = sphi 0, %s69
    $region4: #{tpu_custom_call.1} parent=1 // loop_header_branch
      %16 = sbr.rel (%p14) target = $region8
    $region5: #{tpu_custom_call.1} parent=1 // loop_body
      %s18 = ssub.s32 %s13, 1
      %s19 = ssub.s32 %s13, 2
      %s26 = sadd.s32 1, %s21
      %p27 = scmp.ge.s32.totalorder %s26, 1
      %s28 = scalar_select %p27, 0, %s26
      %s29 = sadd.s32 1, %s20
      %s30 = scalar_select %p27, %s29, %s20
      %p31 = scmp.ge.s32.totalorder %s30, 2
      %s32 = scalar_select %p31, 0, %s30
      %s33 = ssub.s32 %s20, %s32
      %s34 = ssub.s32 %s21, %s28
      %s35 = sor.u32 %s33, %s34
      %p36 = scmp.eq.s32.totalorder %s35, 0
      %s38 = sadd.s32 %s37, 1
      %s39 = scalar_select %p36, %s37, %s38
      %p42 = pneg %p36
      %p43 = scmp.eq.s32.totalorder %s13, 1
      %p44 = por %p42, %p43
      %p45 = scmp.ne.s32.totalorder %s37, %s40
      %p46 = scmp.eq.s32.totalorder %s13, 0
      %p47 = por %p45, %p46
      %p48 = scmp.ne.s32.totalorder %s37, %s40
      %p49 = scmp.eq.s32.totalorder %s18, 1
      %p50 = por %p48, %p49
      %p51 = scmp.ne.s32.totalorder %s40, %s41
      %p52 = scmp.eq.s32.totalorder %s18, 0
      %p53 = por %p51, %p52
      %p54 = scmp.ne.s32.totalorder %s40, %s41
      %p55 = scmp.eq.s32.totalorder %s19, 1
      %p56 = por %p54, %p55
      %p58 = scmp.ne.s32.totalorder %s41, %s57
      %p59 = scmp.eq.s32.totalorder %s19, 0
      %p60 = por %p58, %p59
      %s61 = ssub.s32 %s20, %s32
      %s62 = ssub.s32 %s21, %s28
      %s63 = sor.u32 %s61, %s62
      %p64 = scmp.eq.s32.totalorder %s63, 0
      %s66 = sadd.s32 %s65, 1
      %s67 = scalar_select %p64, %s65, %s66
      %p70 = pneg %p64
      %p71 = scmp.eq.s32.totalorder %s13, 1
      %p72 = por %p70, %p71
      %p73 = scmp.ne.s32.totalorder %s65, %s68
      %p74 = scmp.eq.s32.totalorder %s13, 0
      %p75 = por %p73, %p74
      %p76 = scmp.ne.s32.totalorder %s65, %s68
      %p77 = scmp.eq.s32.totalorder %s18, 1
      %p78 = por %p76, %p77
      %p79 = scmp.ne.s32.totalorder %s68, %s69
      %p80 = scmp.eq.s32.totalorder %s18, 0
      %p81 = por %p79, %p80
      %p82 = scmp.ne.s32.totalorder %s68, %s69
      %p83 = scmp.eq.s32.totalorder %s19, 1
      %p84 = por %p82, %p83
      %p86 = scmp.ne.s32.totalorder %s69, %s85
      %p87 = scmp.eq.s32.totalorder %s19, 0
      %p88 = por %p86, %p87
      %p89 = scmp.le.s32.totalorder 1, %s13
      %p90 = scmp.lt.s32.totalorder %s13, 3
      %p91 = pnand %p89, %p90
      %p92 = pneg %p91
      // Predicated region
      $region9: #{tpu_custom_call.1} parent=5 // pred_check
        _
      $region10: #{tpu_custom_call.1} parent=5 // pred_check_branch
        %94 = sbr.rel (%p91) target = $region12
      $region11: #{tpu_custom_call.1} parent=5 // pred_region
        %s95 = ssub.s32 %s13, 1
      $region12: #{tpu_custom_call.1} parent=5 // pred_fallthru
        _
      %p96 = scmp.lt.s32.totalorder %s13, 2
      // Predicated region
      $region13: #{tpu_custom_call.1} parent=5 // pred_check
        %p97 = pneg %p96
      $region14: #{tpu_custom_call.1} parent=5 // pred_check_branch
        %99 = sbr.rel (%p97) target = $region16
      $region15: #{tpu_custom_call.1} parent=5 // pred_region
        // Predicated region
        $region17: #{tpu_custom_call.1} parent=15 // pred_check
          %p100 = pneg %p47
        $region18: #{tpu_custom_call.1} parent=15 // pred_check_branch
          %102 = sbr.rel (%p100) target = $region20
        $region19: #{tpu_custom_call.1} parent=15 // pred_region
          %s103 = sand.u32 %s37, 1
          %s104 = scalar_lea.sflag [#allocation3], %s103
          %s105 = sand.u32 %s37, 1
          %s106 = smul.addr %s105, 48
          %s107 = scalar_lea.vmem [#allocation2], %s106
          %s109 = ssub.s32 768, 768
          %110 = vsyncadd %s104, %s109
          %s111 = smul.addr %s21, 16
          %s112 = smul.addr %s20, 48
          %s113 = sadd.s32 %s111, %s112
          %s114 = smul.addr %s113, 16
          %s115 = scalar_lea.hbm %s0, %s114
          %s116 = sshll.u32 %s107, 4
          %s117 = int_to_ptr.vmem [resolvable:$true] %s116
          %122 = dma.hbm_to_vmem [thread:$0]  %s115, 768, %s117, %s104, 256, 256, 16
        $region20: #{tpu_custom_call.1} parent=15 // pred_fallthru
          _
      $region16: #{tpu_custom_call.1} parent=5 // pred_fallthru
        _
      %p123 = scmp.le.s32.totalorder 1, %s13
      %p124 = scmp.lt.s32.totalorder %s13, 3
      %p125 = pnand %p123, %p124
      %p126 = pneg %p125
      // Predicated region
      $region21: #{tpu_custom_call.1} parent=5 // pred_check
        _
      $region22: #{tpu_custom_call.1} parent=5 // pred_check_branch
        %128 = sbr.rel (%p125) target = $region24
      $region23: #{tpu_custom_call.1} parent=5 // pred_region
        %s129 = ssub.s32 %s13, 1
        %s130 = sand.u32 %s40, 1
        %s131 = scalar_lea.sflag [#allocation3], %s130
        %s132 = sand.u32 %s40, 1
        %s133 = smul.addr %s132, 48
        %s134 = scalar_lea.vmem [#allocation2], %s133
        // Predicated region
        $region25: #{tpu_custom_call.1} parent=23 // pred_check
          %p135 = pneg %p53
        $region26: #{tpu_custom_call.1} parent=23 // pred_check_branch
          %137 = sbr.rel (%p135) target = $region28
        $region27: #{tpu_custom_call.1} parent=23 // pred_region
          %138 = dma.done %s131, 768
        $region28: #{tpu_custom_call.1} parent=23 // pred_fallthru
          _
        %s139 = sand.u32 %s40, 1
        %s140 = scalar_lea.sflag [#allocation3], %s139
        %s141 = sand.u32 %s40, 1
        %s142 = smul.addr %s141, 48
        %s143 = scalar_lea.vmem [#allocation2], %s142
        %p144 = pneg %p53
        %p145 = pneg %p50
        %p146 = pneg %p81
        %p147 = pneg %p78
        %s148 = sand.u32 %s68, 1
        %s149 = scalar_lea.sflag [#allocation4], %s148
        %s150 = sand.u32 %s68, 1
        %s151 = smul.addr %s150, 16
        %s152 = scalar_lea.vmem [#allocation5], %s151
        %v153 = vld [vmem:[%s134] sm:$0xff]
        %v154 = vld [vmem:[%s134 + $0x8] sm:$0xff]
        %s155 = scalar_lea.vmem %s134, 16 [#allocation2]
        %v156 = vld [vmem:[%s155] sm:$0xff]
        %v157 = vld [vmem:[%s155 + $0x8] sm:$0xff]
        %s158 = scalar_lea.vmem %s134, 32 [#allocation2]
        %v159 = vld [vmem:[%s158] sm:$0xff]
        %v160 = vld [vmem:[%s158 + $0x8] sm:$0xff]
        %v161 = vmul.f32 %v153, 0.2989
        %v162 = vmul.f32 %v154, 0.2989
        %v163 = vmul.f32 %v156, 0.587
        %v164 = vmul.f32 %v157, 0.587
        %v165 = vadd.f32 %v161, %v163
        %v166 = vadd.f32 %v162, %v164
        %v167 = vmul.f32 %v159, 0.114
        %v168 = vmul.f32 %v160, 0.114
        %v169 = vadd.f32 %v165, %v167
        %v170 = vadd.f32 %v166, %v168
        %171 = vst [vmem:[%s152] sm:$0xff] %v169
        %172 = vst [vmem:[%s152 + $0x8] sm:$0xff] %v170
        %s173 = sand.u32 %s68, 1
        %s174 = scalar_lea.sflag [#allocation4], %s173
        %s175 = sand.u32 %s68, 1
        %s176 = smul.addr %s175, 16
        %s177 = scalar_lea.vmem [#allocation5], %s176
        // Predicated region
        $region29: #{tpu_custom_call.1} parent=23 // pred_check
          %p178 = pneg %p78
        $region30: #{tpu_custom_call.1} parent=23 // pred_check_branch
          %180 = sbr.rel (%p178) target = $region32
        $region31: #{tpu_custom_call.1} parent=23 // pred_region
          %s182 = ssub.s32 256, 256
          %183 = vsyncadd %s174, %s182
          %s184 = smul.addr %s23, 16
          %s185 = smul.addr %s22, 16
          %s186 = sadd.s32 %s184, %s185
          %s187 = smul.addr %s186, 16
          %s188 = scalar_lea.hbm %s1, %s187
          %s190 = sshll.u32 %s177, 4
          %s191 = int_to_ptr.vmem [resolvable:$true] %s190
          %193 = dma.vmem_to_hbm [thread:$0]  %s191, 256, %s188, %s174
        $region32: #{tpu_custom_call.1} parent=23 // pred_fallthru
          _
      $region24: #{tpu_custom_call.1} parent=5 // pred_fallthru
        _
      %p194 = scmp.le.s32.totalorder 2, %s13
      // Predicated region
      $region33: #{tpu_custom_call.1} parent=5 // pred_check
        %p195 = pneg %p194
      $region34: #{tpu_custom_call.1} parent=5 // pred_check_branch
        %197 = sbr.rel (%p195) target = $region36
      $region35: #{tpu_custom_call.1} parent=5 // pred_region
        %s198 = ssub.s32 %s13, 2
        // Predicated region
        $region37: #{tpu_custom_call.1} parent=35 // pred_check
          %p199 = pneg %p84
        $region38: #{tpu_custom_call.1} parent=35 // pred_check_branch
          %201 = sbr.rel (%p199) target = $region40
        $region39: #{tpu_custom_call.1} parent=35 // pred_region
          %s202 = sand.u32 %s69, 1
          %s203 = scalar_lea.sflag [#allocation4], %s202
          %s204 = sand.u32 %s69, 1
          %s205 = smul.addr %s204, 16
          %s206 = scalar_lea.vmem [#allocation5], %s205
          %207 = dma.done %s203, 256
        $region40: #{tpu_custom_call.1} parent=35 // pred_fallthru
          _
      $region36: #{tpu_custom_call.1} parent=5 // pred_fallthru
        _
    $region6: #{tpu_custom_call.1} parent=1 // loop_footer
      %s17 = sadd.s32 1, %s13
    $region7: #{tpu_custom_call.1} parent=1 // loop_footer_branch
      %12 = sbr.rel target = $region3
    $region8: #{tpu_custom_call.1} parent=1 // loop_exit
      _
    %208 = vsyncpa [#allocation3], 1
    %s209 = scalar_lea.sflag [#allocation3], 1
    %210 = vsyncpa %s209, 1
    %211 = vsyncpa [#allocation4], 1
    %s212 = scalar_lea.sflag [#allocation4], 1
    %213 = vsyncpa %s212, 1

</llo_original>
